<compile_context>
chip_gen: v5e
topology: v5e:2x2
jax: 0.10.0
libtpu: 0.0.40
codegen_flags: <defaults>
</compile_context>

<pallas_src>
import math
from functools import partial

import jax
import jax.numpy as jnp
from jax.experimental import pallas as pl
from jax.experimental.pallas import tpu as pltpu


# ---------------------------------------------------------------------------
# PE buffer (== nn.Module __init__ double loop, vectorized).
# For column c: even c -> sin(pos / 10000**(2c/d)), odd c -> cos(pos / 10000**(2c/d))
# (matches the module's non-canonical odd-column exponent exactly).
# ---------------------------------------------------------------------------
def make_pe_table(max_seq_len: int, d_model: int) -> jnp.ndarray:
    pos = jnp.arange(max_seq_len, dtype=jnp.float32)[:, None]      # (L, 1)
    col = jnp.arange(d_model, dtype=jnp.float32)[None, :]          # (1, D)
    denom = jnp.power(jnp.float32(10000.0), 2.0 * col / float(d_model))
    angle = pos / denom                                            # (L, D)
    pe = jnp.where((jnp.arange(d_model) % 2 == 0)[None, :],
                   jnp.sin(angle), jnp.cos(angle))
    return pe.astype(jnp.float32)                                  # (L, D), f32 buffer


# ---------------------------------------------------------------------------
# Kernel: one mul + one add per vreg. pe block broadcasts over the leading
# batch dim. Compute in f32, store in the output's dtype.
# ---------------------------------------------------------------------------
def _scale_add_kernel(x_ref, pe_ref, o_ref, *, scale):
    x = x_ref[...].astype(jnp.float32)
    o_ref[...] = (x * scale + pe_ref[...]).astype(o_ref.dtype)


# ---------------------------------------------------------------------------
# Tiling helpers.
# ---------------------------------------------------------------------------
_DEFAULT_BLOCK_BYTES = 2 * 1024 * 1024   # past the HBM-roofline knee on v5e/v6e


def _per_buffer_budget() -> int:
    # v7x: ~2.3x v6e HBM BW -> per-step overhead is a bigger slice of each
    # (shorter) step; 4 MiB blocks amortize it and the 3-stream double-buffered
    # footprint (~24 MiB) still fits the 32 MiB default scoped VMEM.
    try:
        if "v7" in jax.devices()[0].device_kind.lower():
            return 4 * 1024 * 1024
    except Exception:
        pass
    return _DEFAULT_BLOCK_BYTES


def _row_granularity(itemsize: int) -> int:
    # Sub-32-bit dtypes pack along sublanes: f32 -> 8 rows/vreg, bf16 -> 16, int8/fp8 -> 32.
    return 8 * max(1, 4 // int(itemsize))


# ---------------------------------------------------------------------------
# Forward pass.
# ---------------------------------------------------------------------------
def _positional_encoder_impl(x, pe_table, *, block_bytes=None):
    """x: (B, S, D); pe_table: (max_seq_len, D) float32. Returns (B, S, D) in x.dtype."""
    B, S, D = x.shape
    L, Dp = pe_table.shape
    assert Dp == D and S <= L, "pe buffer too short / d_model mismatch"

    scale = float(math.sqrt(D))
    itemsize = jnp.dtype(x.dtype).itemsize
    gran = _row_granularity(itemsize)
    budget = int(block_bytes) if block_bytes is not None else _per_buffer_budget()

    kernel = partial(_scale_add_kernel, scale=scale)
    cost = pl.CostEstimate(
        flops=2 * B * S * D,
        transcendentals=0,
        bytes_accessed=2 * B * S * D * itemsize + S * D * 4,   # x read + out write + pe once
    )

    # ---- Path A: non-lane-dense d_model (D % 128 != 0). Flatten each batch
    # element to one lane-dense row of width S*D (unmasked full-width stores)
    # and tile over batch rows. pe uses a constant index_map -> DMA'd once and
    # revisited on every grid step.
    if D % 128 != 0:
        row_bytes = S * D * itemsize
        tile_b = None
        if B * row_bytes <= budget:
            tile_b, n_b = B, 1
        elif gran * row_bytes <= budget:
            cap_b = (budget // row_bytes) // gran * gran
            divs = [t for t in range(gran, min(cap_b, B) + 1, gran) if B % t == 0]
            if divs:
                tile_b = max(divs)
                n_b = B // tile_b
            else:
                tile_b = min(cap_b, B - (B % gran))
                n_b = pl.cdiv(B, tile_b)              # ragged last block masked
        if tile_b is not None:
            x2 = x.reshape(B, S * D)
            pe_row = pe_table[:S].reshape(1, S * D)   # f32; S*D bytes, tiny vs x traffic
            out = pl.pallas_call(
                kernel,
                out_shape=jax.ShapeDtypeStruct((B, S * D), x.dtype),
                grid_spec=pltpu.PrefetchScalarGridSpec(
                    num_scalar_prefetch=0,
                    grid=(n_b,),
                    in_specs=[pl.BlockSpec((tile_b, S * D), lambda i: (i, 0)),
                              pl.BlockSpec((1, S * D), lambda i: (0, 0))],
                    out_specs=pl.BlockSpec((tile_b, S * D), lambda i: (i, 0)),
                ),
                compiler_params=pltpu.CompilerParams(
                    dimension_semantics=("parallel",)),
                cost_estimate=cost,
            )(x2, pe_row)
            return out.reshape(B, S, D)
        # else: rows too big for the flattened layout -> fall through to Path B
        # (full-D last-dim blocks are always legal).

    # ---- Path B: 2-D grid (s_blocks, batch_blocks), batch innermost.
    # pe's block index depends only on the outer s axis -> no re-DMA across
    # the inner batch loop.
    row_bytes = D * itemsize
    if S * row_bytes <= budget or S <= gran:
        tile_s, n_s = S, 1
    else:
        cap = max(gran, (budget // row_bytes) // gran * gran)
        cap = min(cap, (S // gran) * gran)
        divs = [t for t in range(gran, cap + 1, gran) if S % t == 0]
        if divs:
            tile_s = max(divs)
            n_s = S // tile_s
        else:
            tile_s = cap
            n_s = pl.cdiv(S, tile_s)                  # ragged last block masked

    max_b = max(1, budget // (tile_s * row_bytes))
    tile_b = max(t for t in range(1, min(B, max_b) + 1) if B % t == 0)
    n_b = B // tile_b

    # Pass the whole f32 buffer; only the first n_s blocks are ever fetched.
    # (If tile_s == S is not sublane-aligned, slice so the pe block equals the
    # full array dims -- always a legal block shape.)
    if tile_s == S and (S % 8 != 0) and S != L:
        pe_in = pe_table[:S].reshape(1, S, D)
    else:
        pe_in = pe_table.reshape(1, L, D)

    sems = ("parallel", "arbitrary") if n_s > 1 else ("arbitrary", "parallel")

    return pl.pallas_call(
        kernel,
        out_shape=jax.ShapeDtypeStruct((B, S, D), x.dtype),
        grid_spec=pltpu.PrefetchScalarGridSpec(
            num_scalar_prefetch=0,
            grid=(n_s, n_b),
            in_specs=[pl.BlockSpec((tile_b, tile_s, D), lambda i, j: (j, i, 0)),
                      pl.BlockSpec((1, tile_s, D), lambda i, j: (0, i, 0))],
            out_specs=pl.BlockSpec((tile_b, tile_s, D), lambda i, j: (j, i, 0)),
        ),
        compiler_params=pltpu.CompilerParams(dimension_semantics=sems),
        cost_estimate=cost,
    )(x, pe_in)


positional_encoder = jax.jit(_positional_encoder_impl, static_argnames=("block_bytes",))


if __name__ == "__main__":
    # Module-equivalent setup: build the pe buffer once (== register_buffer).
    d_model, max_seq_len = 32, 64
    batch, seq = 2, 8

    key = jax.random.PRNGKey(0)
    x = jax.random.normal(key, (batch, seq, d_model), dtype=jnp.float32)
    pe_table = make_pe_table(max_seq_len, d_model)

    out = jax.block_until_ready(positional_encoder(x, pe_table))
    ref = x * math.sqrt(d_model) + pe_table[:seq][None, :, :]
    assert out.shape == (batch, seq, d_model)
    assert jnp.allclose(out, ref, atol=1e-5, rtol=1e-5)

    # Lane-dense path (D % 128 == 0), single s-block.
    b2, s2, d2 = 2, 16, 128
    x2 = jax.random.normal(jax.random.PRNGKey(0), (b2, s2, d2), dtype=jnp.float32)
    pe2 = make_pe_table(32, d2)
    out2 = jax.block_until_ready(positional_encoder(x2, pe2))
    ref2 = x2 * math.sqrt(d2) + pe2[:s2][None, :, :]
    assert jnp.allclose(out2, ref2, atol=1e-5, rtol=1e-5)

    # Multi-block (s_blocks, batch) grid: pe block revisited across the inner
    # batch steps (no re-DMA). Force a tiny block budget to exercise the path
    # at small shapes.
    b3, s3, d3 = 3, 64, 128
    x3 = jax.random.normal(jax.random.PRNGKey(0), (b3, s3, d3), dtype=jnp.float32)
    pe3 = make_pe_table(64, d3)
    out3 = jax.block_until_ready(
        positional_encoder(x3, pe3, block_bytes=8 * d3 * 4))
    ref3 = x3 * math.sqrt(d3) + pe3[:s3][None, :, :]
    assert jnp.allclose(out3, ref3, atol=1e-5, rtol=1e-5)

    print("KERNEL_OK")
</pallas_src>

<mosaic_0001>
module attributes {stable_mosaic.version = 11 : i64} {
  func.func @_scale_add_kernel(%arg0: i32, %arg1: memref<2x256xf32, #tpu.memory_space<vmem>>, %arg2: memref<1x256xf32, #tpu.memory_space<vmem>>, %arg3: memref<2x256xf32, #tpu.memory_space<vmem>>) attributes {dimension_semantics = [#tpu.dimension_semantics<parallel>], iteration_bounds = array<i64: 1>, scalar_prefetch = 0 : i64, scratch_operands = 0 : i64, tpu.core_type = #tpu.core_type<tc>, window_params = [{transform_indices = @transform_0, window_bounds = array<i64: 2, 256>}, {pipeline_mode = #tpu.pipeline_mode<synchronous>, transform_indices = @transform_1, window_bounds = array<i64: 1, 256>}, {transform_indices = @transform_2, window_bounds = array<i64: 2, 256>}]} {
    %c0 = arith.constant 0 : index
    %c0_0 = arith.constant 0 : index
    %0 = vector.load %arg1[%c0, %c0_0] : memref<2x256xf32, #tpu.memory_space<vmem>>, vector<2x256xf32>
    %cst = arith.constant 5.65685415 : f32
    %1 = vector.broadcast %cst : f32 to vector<2x256xf32>
    %2 = arith.mulf %0, %1 : vector<2x256xf32>
    %c0_1 = arith.constant 0 : index
    %c0_2 = arith.constant 0 : index
    %3 = vector.load %arg2[%c0_1, %c0_2] : memref<1x256xf32, #tpu.memory_space<vmem>>, vector<1x256xf32>
    %4 = vector.broadcast %3 : vector<1x256xf32> to vector<2x256xf32>
    %5 = arith.addf %2, %4 : vector<2x256xf32>
    %c0_3 = arith.constant 0 : index
    %c0_4 = arith.constant 0 : index
    %6 = vector.load %arg3[%c0_3, %c0_4] : memref<2x256xf32, #tpu.memory_space<vmem>>, vector<2x256xf32>
    tpu.vector_store %arg3[%c0_3, %c0_4], %5 {strides = array<i32>} : memref<2x256xf32, #tpu.memory_space<vmem>>, vector<2x256xf32>,
    return
  }
  func.func @transform_0(%arg0: i32) -> (i32, i32) {
    %c0_i32 = arith.constant 0 : i32
    %c0_i32_0 = arith.constant 0 : i32
    return %arg0, %c0_i32 : i32, i32
  }
  func.func @transform_1(%arg0: i32) -> (i32, i32) {
    %c0_i32 = arith.constant 0 : i32
    %c0_i32_0 = arith.constant 0 : i32
    %c0_i32_1 = arith.constant 0 : i32
    return %c0_i32, %c0_i32_0 : i32, i32
  }
  func.func @transform_2(%arg0: i32) -> (i32, i32) {
    %c0_i32 = arith.constant 0 : i32
    %c0_i32_0 = arith.constant 0 : i32
    return %arg0, %c0_i32 : i32, i32
  }
}

</mosaic_0001>

<llo_original>
// kernel: _positional_encoder_impl.1
$region0: #{_positional_encoder_impl.1}
  #allocation0 [shape = 'u32[]', space=smem, size = 0x4, offset = 0x4, fixed_abs, tag = 'smem constant byte address 0x4 - core index']
  #allocation1 [shape = 'u32[72,128]{1,0:T(1,128)}', space=vmem, size = 0x9000, scoped, tag = 'internal scratch']
  %s0 = inlined_call_operand.vmem [shape: f32[2,256], index: 0, kind: input, shape index: {}]
  %s1 = inlined_call_operand.vmem [shape: f32[1,256], index: 1, kind: input, shape index: {}]
  %s2 = inlined_call_operand.vmem [shape: f32[2,256], index: 2, kind: output, shape index: {}]
  %s3 = sld [smem:[#allocation0]]
  $region18: #{_positional_encoder_impl.1} parent=0
    _
  %s5 = ssub.s32 1, %s3
  %s6 = scalar_select 0, %s5, %s3
  // Predicated region
  $region2: #{_positional_encoder_impl.1} parent=0 // pred_check
    _
  $region3: #{_positional_encoder_impl.1} parent=0 // pred_check_branch
    %8 = sbr.rel (0) target = $region5
  $region4: #{_positional_encoder_impl.1} parent=0 // pred_region
    _
  $region5: #{_positional_encoder_impl.1} parent=0 // pred_fallthru
    _
  // Predicated region
  $region6: #{_positional_encoder_impl.1} parent=0 // pred_check
    _
  $region7: #{_positional_encoder_impl.1} parent=0 // pred_check_branch
    %10 = sbr.rel (0) target = $region9
  $region8: #{_positional_encoder_impl.1} parent=0 // pred_region
    _
  $region9: #{_positional_encoder_impl.1} parent=0 // pred_fallthru
    _
  %v11 = vld [vmem:[%s0] sm:$0xf]
  %v12 = vmul.f32 %v11, 5.656854
  %v13 = vld [vmem:[%s1] sm:$0x3]
  %v15 = vperm.slane %v13, 0
  %v16 = vperm.slane %v13, 1
  %v17 = vrot.slane %v16, 6
  %vm18 = vcmask 1041408
  %v19 = vsel %vm18, %v15, %v17
  %v21 = vadd.f32 %v12, %v19
  %22 = vst [vmem:[%s2] sm:$0xf] %v21
  // Predicated region
  $region10: #{_positional_encoder_impl.1} parent=0 // pred_check
    _
  $region11: #{_positional_encoder_impl.1} parent=0 // pred_check_branch
    %24 = sbr.rel (0) target = $region13
  $region12: #{_positional_encoder_impl.1} parent=0 // pred_region
    _
  $region13: #{_positional_encoder_impl.1} parent=0 // pred_fallthru
    _
  // Predicated region
  $region14: #{_positional_encoder_impl.1} parent=0 // pred_check
    _
  $region15: #{_positional_encoder_impl.1} parent=0 // pred_check_branch
    %26 = sbr.rel (0) target = $region17
  $region16: #{_positional_encoder_impl.1} parent=0 // pred_region
    _
  $region17: #{_positional_encoder_impl.1} parent=0 // pred_fallthru
    _

</llo_original>
